<compile_context>
chip_gen: v6e
topology: v6e:2x2x1
jax: 0.10.0
libtpu: 0.0.40
codegen_flags: <defaults>
</compile_context>

<pallas_src>
import jax
import jax.numpy as jnp
from jax.experimental import pallas as pl
from jax.experimental.pallas import tpu as pltpu

LANE = 128    # vreg lane width
SUB = 8       # vreg sublane count
TB_CAP = 512  # max batch-tile rows (amortizes the ~0.35us per-grid-step overhead)


def _round_up(x, m):
    return (x + m - 1) // m * m


def _pad2d(x, shape):
    return jnp.pad(x, ((0, shape[0] - x.shape[0]), (0, shape[1] - x.shape[1])))


def _critic_kernel(s_ref, a_ref,
                   w1s_ref, w1a_ref, b1_ref,
                   w2_ref, b2_ref,
                   w3_ref, b3_ref,
                   w4_ref, b4_ref,
                   q_ref):
    """One batch tile of the full MLP; all weights resident in VMEM."""
    wdt = w2_ref.dtype  # MXU input dtype (bf16 by default), f32 accumulation

    # Layer 1 with the concat folded in: cat(s,a) @ w1 == s @ w1_s + a @ w1_a.
    h = (jnp.dot(s_ref[...].astype(wdt), w1s_ref[...],
                 preferred_element_type=jnp.float32)
         + jnp.dot(a_ref[...].astype(wdt), w1a_ref[...],
                   preferred_element_type=jnp.float32)
         + b1_ref[...])
    h = jnp.maximum(h, 0.0)

    h = jnp.dot(h.astype(wdt), w2_ref[...],
                preferred_element_type=jnp.float32) + b2_ref[...]
    h = jnp.maximum(h, 0.0)

    h = jnp.dot(h.astype(wdt), w3_ref[...],
                preferred_element_type=jnp.float32) + b3_ref[...]
    h = jnp.maximum(h, 0.0)

    # Final [hd,1] layer, emitted lane-dense: q_row = w4_row @ h.T -> [1, tb].
    # XLU transpose + tiny MXU matvec; packs 128 batch q's per vreg so the HBM
    # writeback is b_pad*4 bytes instead of a [tb,128] broadcast slab.
    q = jnp.dot(w4_ref[...], h.T, preferred_element_type=jnp.float32)
    q = q + b4_ref[0, 0]                     # scalar bias from SMEM
    q_ref[...] = q.astype(q_ref.dtype)


def pack_critic_params(params, state_dim, weight_dtype=jnp.bfloat16):
    """One-time host-side prep:
       * split w1 by state/action rows (fuses the concat into layer 1),
       * zero-pad hidden dims to the 128-lane width (exact: padded hidden units
         are ReLU(0)=0 and feed zero weight rows),
       * cast the big matmul weights to bf16; biases / w4 row stay f32,
       * store w4 as a [1, hd_p] row vector and b4 as a [1,1] SMEM scalar."""
    (w1, b1), (w2, b2), (w3, b3), (w4, b4) = params
    hd = w2.shape[0]
    hd_p = _round_up(hd, LANE)

    w1_s = _pad2d(w1[:state_dim], (state_dim, hd_p)).astype(weight_dtype)
    w1_a = _pad2d(w1[state_dim:], (w1.shape[0] - state_dim, hd_p)).astype(weight_dtype)
    b1_p = _pad2d(b1, (1, hd_p)).astype(jnp.float32)
    w2_p = _pad2d(w2, (hd_p, hd_p)).astype(weight_dtype)
    b2_p = _pad2d(b2, (1, hd_p)).astype(jnp.float32)
    w3_p = _pad2d(w3, (hd_p, hd_p)).astype(weight_dtype)
    b3_p = _pad2d(b3, (1, hd_p)).astype(jnp.float32)
    w4_r = _pad2d(w4.T, (1, hd_p)).astype(jnp.float32)   # tiny final matvec, keep f32
    b4_p = b4.reshape(1, 1).astype(jnp.float32)
    return (w1_s, w1_a, b1_p, w2_p, b2_p, w3_p, b3_p, w4_r, b4_p)


def _choose_batch_tiling(batch):
    """Pick (tile_rows, padded_batch, n_steps).

    * tiles are multiples of 128 so the packed [1, tb] q output is lane-dense,
    * large batches get up to 512-row tiles (amortize per-grid-step overhead),
    * any batch > 128 gets at least 2 grid steps so both v7x TensorCores engage,
    * n_steps = cdiv keeps dead padding under one tile (no fully dead tiles)."""
    b = max(int(batch), 1)
    n_steps = max(pl.cdiv(b, TB_CAP), 2 if b > LANE else 1)
    tb = _round_up(pl.cdiv(b, n_steps), LANE)
    n_steps = pl.cdiv(b, tb)
    return tb, tb * n_steps, n_steps


def critic_forward(s, a, packed):
    """Pallas forward: pads batch only, tiles over batch, returns q as [B,1]."""
    B, sd = s.shape
    ad = a.shape[1]
    w1_s, w1_a, b1, w2, b2, w3, b3, w4_r, b4 = packed
    hd_p = w2.shape[0]

    tb, b_pad, n_steps = _choose_batch_tiling(B)

    # Only the batch dim needs padding; feature dims keep their real width.
    if b_pad != B:
        s = jnp.pad(s, ((0, b_pad - B), (0, 0)))
        a = jnp.pad(a, ((0, b_pad - B), (0, 0)))

    # Residency guard: all-weights-resident design has only ~64 MiB/TC on v7x,
    # and default double-buffering doubles the footprint of constant-index blocks.
    weight_bytes = sum(int(p.size) * p.dtype.itemsize for p in packed)
    act_bytes = tb * (sd + ad) * s.dtype.itemsize + tb * 4
    vmem_est = 2 * (weight_bytes + act_bytes)
    if vmem_est > 48 * 1024 * 1024:
        # TODO(synk): tile the hidden dim with pltpu.emit_pipeline instead of
        # keeping all four weight matrices resident once this trips.
        raise ValueError(f"~{vmem_est >> 20} MiB resident exceeds v7x VMEM budget; "
                         "use bf16 weights or tile the hidden dimension.")

    res = lambda i: (0, 0)   # constant-index (resident) blocks: never re-fetched
    in_specs = [
        pl.BlockSpec((tb, sd), lambda i: (i, 0)),            # s tile (unpadded feat)
        pl.BlockSpec((tb, ad), lambda i: (i, 0)),            # a tile (unpadded feat)
        pl.BlockSpec((sd, hd_p), res),                       # w1_s (resident)
        pl.BlockSpec((ad, hd_p), res),                       # w1_a (resident)
        pl.BlockSpec((1, hd_p), res),                        # b1
        pl.BlockSpec((hd_p, hd_p), res),                     # w2
        pl.BlockSpec((1, hd_p), res),                        # b2
        pl.BlockSpec((hd_p, hd_p), res),                     # w3
        pl.BlockSpec((1, hd_p), res),                        # b3
        pl.BlockSpec((1, hd_p), res),                        # w4 row
        pl.BlockSpec(memory_space=pltpu.MemorySpace.SMEM),   # b4 scalar (SMEM)
    ]
    out_specs = pl.BlockSpec((1, tb), lambda i: (0, i))      # packed, lane-dense q row

    flops = 2 * b_pad * (sd * hd_p + ad * hd_p + 2 * hd_p * hd_p + hd_p)
    bytes_accessed = (b_pad * (sd + ad) * s.dtype.itemsize
                      + weight_bytes + b_pad * 4)

    q_row = pl.pallas_call(
        _critic_kernel,
        out_shape=jax.ShapeDtypeStruct((1, b_pad), jnp.float32),
        grid=(n_steps,),
        in_specs=in_specs,
        out_specs=out_specs,
        compiler_params=pltpu.CompilerParams(
            dimension_semantics=("parallel",),
            vmem_limit_bytes=64 * 1024 * 1024),
        cost_estimate=pl.CostEstimate(
            flops=int(flops), transcendentals=0,
            bytes_accessed=int(bytes_accessed)),
    )(s, a, w1_s, w1_a, b1, w2, b2, w3, b3, w4_r, b4)

    return q_row[0, :B][:, None]


def init_critic_params(key, state_dim, action_dim, hidden_dim):
    """PyTorch-like init (uniform(-1/sqrt(fan_in), 1/sqrt(fan_in))).
    Weights stored as [in_features, out_features]; biases as [1, out_features]."""
    dims = [(state_dim + action_dim, hidden_dim),
            (hidden_dim, hidden_dim),
            (hidden_dim, hidden_dim),
            (hidden_dim, 1)]
    params = []
    for fan_in, fan_out in dims:
        key, kw, kb = jax.random.split(key, 3)
        bound = 1.0 / jnp.sqrt(float(fan_in))
        w = jax.random.uniform(kw, (fan_in, fan_out), jnp.float32, -bound, bound)
        b = jax.random.uniform(kb, (1, fan_out), jnp.float32, -bound, bound)
        params.append((w, b))
    return params


def critic_reference(s, a, params):
    """Pure-JAX f32 reference for correctness checking."""
    x = jnp.concatenate([s, a], axis=1)
    (w1, b1), (w2, b2), (w3, b3), (w4, b4) = params
    x = jnp.maximum(x @ w1 + b1, 0.0)
    x = jnp.maximum(x @ w2 + b2, 0.0)
    x = jnp.maximum(x @ w3 + b3, 0.0)
    return x @ w4 + b4


if __name__ == "__main__":
    key = jax.random.PRNGKey(0)

    batch, state_dim, action_dim, hidden_dim = 2, 8, 4, 32

    key, ks, ka, kp = jax.random.split(key, 4)
    s = jax.random.normal(ks, (batch, state_dim), jnp.float32)
    a = jax.random.normal(ka, (batch, action_dim), jnp.float32)
    params = init_critic_params(kp, state_dim, action_dim, hidden_dim)

    # Host-side, one-time parameter packing (split w1, pad hidden dims, bf16 cast).
    packed = pack_critic_params(params, state_dim)

    q = critic_forward(s, a, packed)
    q = jax.block_until_ready(q)

    q_ref = critic_reference(s, a, params)
    assert q.shape == (batch, 1), q.shape
    # bf16 MXU inputs with f32 accumulation -> looser tolerance than pure f32.
    assert jnp.allclose(q, q_ref, atol=2e-2, rtol=2e-2), (q, q_ref)

    print("KERNEL_OK")
</pallas_src>

<mosaic_0001>
module attributes {stable_mosaic.version = 11 : i64} {
  func.func @_critic_kernel(%arg0: i32, %arg1: memref<128x8xf32, #tpu.memory_space<vmem>>, %arg2: memref<128x4xf32, #tpu.memory_space<vmem>>, %arg3: memref<8x128xbf16, #tpu.memory_space<vmem>>, %arg4: memref<4x128xbf16, #tpu.memory_space<vmem>>, %arg5: memref<1x128xf32, #tpu.memory_space<vmem>>, %arg6: memref<128x128xbf16, #tpu.memory_space<vmem>>, %arg7: memref<1x128xf32, #tpu.memory_space<vmem>>, %arg8: memref<128x128xbf16, #tpu.memory_space<vmem>>, %arg9: memref<1x128xf32, #tpu.memory_space<vmem>>, %arg10: memref<1x128xf32, #tpu.memory_space<vmem>>, %arg11: memref<1x1xf32, #tpu.memory_space<smem>>, %arg12: memref<1x128xf32, #tpu.memory_space<vmem>>) attributes {dimension_semantics = [#tpu.dimension_semantics<parallel>], iteration_bounds = array<i64: 1>, scalar_prefetch = 0 : i64, scratch_operands = 0 : i64, tpu.core_type = #tpu.core_type<tc>, window_params = [{transform_indices = @transform_0, window_bounds = array<i64: 128, 8>}, {transform_indices = @transform_1, window_bounds = array<i64: 128, 4>}, {pipeline_mode = #tpu.pipeline_mode<synchronous>, transform_indices = @transform_2, window_bounds = array<i64: 8, 128>}, {pipeline_mode = #tpu.pipeline_mode<synchronous>, transform_indices = @transform_3, window_bounds = array<i64: 4, 128>}, {pipeline_mode = #tpu.pipeline_mode<synchronous>, transform_indices = @transform_4, window_bounds = array<i64: 1, 128>}, {pipeline_mode = #tpu.pipeline_mode<synchronous>, transform_indices = @transform_5, window_bounds = array<i64: 128, 128>}, {pipeline_mode = #tpu.pipeline_mode<synchronous>, transform_indices = @transform_6, window_bounds = array<i64: 1, 128>}, {pipeline_mode = #tpu.pipeline_mode<synchronous>, transform_indices = @transform_7, window_bounds = array<i64: 128, 128>}, {pipeline_mode = #tpu.pipeline_mode<synchronous>, transform_indices = @transform_8, window_bounds = array<i64: 1, 128>}, {pipeline_mode = #tpu.pipeline_mode<synchronous>, transform_indices = @transform_9, window_bounds = array<i64: 1, 128>}, {transform_indices = @transform_10, window_bounds = array<i64: 1, 1>}, {transform_indices = @transform_11, window_bounds = array<i64: 1, 128>}]} {
    %c0 = arith.constant 0 : index
    %c0_0 = arith.constant 0 : index
    %0 = vector.load %arg1[%c0, %c0_0] : memref<128x8xf32, #tpu.memory_space<vmem>>, vector<128x8xf32>
    %1 = arith.truncf %0 : vector<128x8xf32> to vector<128x8xbf16>
    %c0_1 = arith.constant 0 : index
    %c0_2 = arith.constant 0 : index
    %2 = vector.load %arg3[%c0_1, %c0_2] : memref<8x128xbf16, #tpu.memory_space<vmem>>, vector<8x128xbf16>
    %cst = arith.constant dense<0.000000e+00> : vector<128x128xf32>
    %3 = tpu.matmul %1, %2, %cst {dimension_numbers = #tpu.dot_dimension_numbers<[1], [0], [0], [1], [0, 0, 1, 1], [], []>} : vector<128x8xbf16>, vector<8x128xbf16>, vector<128x128xf32> -> vector<128x128xf32>
    %c0_3 = arith.constant 0 : index
    %c0_4 = arith.constant 0 : index
    %4 = vector.load %arg2[%c0_3, %c0_4] : memref<128x4xf32, #tpu.memory_space<vmem>>, vector<128x4xf32>
    %5 = arith.truncf %4 : vector<128x4xf32> to vector<128x4xbf16>
    %c0_5 = arith.constant 0 : index
    %c0_6 = arith.constant 0 : index
    %6 = vector.load %arg4[%c0_5, %c0_6] : memref<4x128xbf16, #tpu.memory_space<vmem>>, vector<4x128xbf16>
    %cst_7 = arith.constant dense<0.000000e+00> : vector<128x128xf32>
    %7 = tpu.matmul %5, %6, %cst_7 {dimension_numbers = #tpu.dot_dimension_numbers<[1], [0], [0], [1], [0, 0, 1, 1], [], []>} : vector<128x4xbf16>, vector<4x128xbf16>, vector<128x128xf32> -> vector<128x128xf32>
    %8 = arith.addf %3, %7 : vector<128x128xf32>
    %c0_8 = arith.constant 0 : index
    %c0_9 = arith.constant 0 : index
    %9 = vector.load %arg5[%c0_8, %c0_9] : memref<1x128xf32, #tpu.memory_space<vmem>>, vector<1x128xf32>
    %10 = vector.broadcast %9 : vector<1x128xf32> to vector<128x128xf32>
    %11 = arith.addf %8, %10 : vector<128x128xf32>
    %cst_10 = arith.constant 0.000000e+00 : f32
    %12 = vector.broadcast %cst_10 : f32 to vector<128x128xf32>
    %13 = arith.maximumf %11, %12 : vector<128x128xf32>
    %14 = arith.truncf %13 : vector<128x128xf32> to vector<128x128xbf16>
    %c0_11 = arith.constant 0 : index
    %c0_12 = arith.constant 0 : index
    %15 = vector.load %arg6[%c0_11, %c0_12] : memref<128x128xbf16, #tpu.memory_space<vmem>>, vector<128x128xbf16>
    %cst_13 = arith.constant dense<0.000000e+00> : vector<128x128xf32>
    %16 = tpu.matmul %14, %15, %cst_13 {dimension_numbers = #tpu.dot_dimension_numbers<[1], [0], [0], [1], [0, 0, 1, 1], [], []>} : vector<128x128xbf16>, vector<128x128xbf16>, vector<128x128xf32> -> vector<128x128xf32>
    %c0_14 = arith.constant 0 : index
    %c0_15 = arith.constant 0 : index
    %17 = vector.load %arg7[%c0_14, %c0_15] : memref<1x128xf32, #tpu.memory_space<vmem>>, vector<1x128xf32>
    %18 = vector.broadcast %17 : vector<1x128xf32> to vector<128x128xf32>
    %19 = arith.addf %16, %18 : vector<128x128xf32>
    %cst_16 = arith.constant 0.000000e+00 : f32
    %20 = vector.broadcast %cst_16 : f32 to vector<128x128xf32>
    %21 = arith.maximumf %19, %20 : vector<128x128xf32>
    %22 = arith.truncf %21 : vector<128x128xf32> to vector<128x128xbf16>
    %c0_17 = arith.constant 0 : index
    %c0_18 = arith.constant 0 : index
    %23 = vector.load %arg8[%c0_17, %c0_18] : memref<128x128xbf16, #tpu.memory_space<vmem>>, vector<128x128xbf16>
    %cst_19 = arith.constant dense<0.000000e+00> : vector<128x128xf32>
    %24 = tpu.matmul %22, %23, %cst_19 {dimension_numbers = #tpu.dot_dimension_numbers<[1], [0], [0], [1], [0, 0, 1, 1], [], []>} : vector<128x128xbf16>, vector<128x128xbf16>, vector<128x128xf32> -> vector<128x128xf32>
    %c0_20 = arith.constant 0 : index
    %c0_21 = arith.constant 0 : index
    %25 = vector.load %arg9[%c0_20, %c0_21] : memref<1x128xf32, #tpu.memory_space<vmem>>, vector<1x128xf32>
    %26 = vector.broadcast %25 : vector<1x128xf32> to vector<128x128xf32>
    %27 = arith.addf %24, %26 : vector<128x128xf32>
    %cst_22 = arith.constant 0.000000e+00 : f32
    %28 = vector.broadcast %cst_22 : f32 to vector<128x128xf32>
    %29 = arith.maximumf %27, %28 : vector<128x128xf32>
    %c0_23 = arith.constant 0 : index
    %c0_24 = arith.constant 0 : index
    %30 = vector.load %arg10[%c0_23, %c0_24] : memref<1x128xf32, #tpu.memory_space<vmem>>, vector<1x128xf32>
    %31 = tpu.transpose %29, [1, 0] : vector<128x128xf32> -> vector<128x128xf32>
    %cst_25 = arith.constant dense<0.000000e+00> : vector<1x128xf32>
    %32 = tpu.matmul %30, %31, %cst_25 {dimension_numbers = #tpu.dot_dimension_numbers<[1], [0], [0], [1], [0, 0, 1, 1], [], []>} : vector<1x128xf32>, vector<128x128xf32>, vector<1x128xf32> -> vector<1x128xf32>
    %c0_26 = arith.constant 0 : index
    %c0_27 = arith.constant 0 : index
    %33 = memref.load %arg11[%c0_26, %c0_27] : memref<1x1xf32, #tpu.memory_space<smem>>
    %34 = vector.broadcast %33 : f32 to vector<1x128xf32>
    %35 = arith.addf %32, %34 : vector<1x128xf32>
    %c0_28 = arith.constant 0 : index
    %c0_29 = arith.constant 0 : index
    %36 = vector.load %arg12[%c0_28, %c0_29] : memref<1x128xf32, #tpu.memory_space<vmem>>, vector<1x128xf32>
    tpu.vector_store %arg12[%c0_28, %c0_29], %35 {strides = array<i32>} : memref<1x128xf32, #tpu.memory_space<vmem>>, vector<1x128xf32>,
    return
  }
  func.func @transform_0(%arg0: i32) -> (i32, i32) {
    %c0_i32 = arith.constant 0 : i32
    %c0_i32_0 = arith.constant 0 : i32
    return %arg0, %c0_i32 : i32, i32
  }
  func.func @transform_1(%arg0: i32) -> (i32, i32) {
    %c0_i32 = arith.constant 0 : i32
    %c0_i32_0 = arith.constant 0 : i32
    return %arg0, %c0_i32 : i32, i32
  }
  func.func @transform_2(%arg0: i32) -> (i32, i32) {
    %c0_i32 = arith.constant 0 : i32
    %c0_i32_0 = arith.constant 0 : i32
    %c0_i32_1 = arith.constant 0 : i32
    return %c0_i32, %c0_i32_0 : i32, i32
  }
  func.func @transform_3(%arg0: i32) -> (i32, i32) {
    %c0_i32 = arith.constant 0 : i32
    %c0_i32_0 = arith.constant 0 : i32
    %c0_i32_1 = arith.constant 0 : i32
    return %c0_i32, %c0_i32_0 : i32, i32
  }
  func.func @transform_4(%arg0: i32) -> (i32, i32) {
    %c0_i32 = arith.constant 0 : i32
    %c0_i32_0 = arith.constant 0 : i32
    %c0_i32_1 = arith.constant 0 : i32
    return %c0_i32, %c0_i32_0 : i32, i32
  }
  func.func @transform_5(%arg0: i32) -> (i32, i32) {
    %c0_i32 = arith.constant 0 : i32
    %c0_i32_0 = arith.constant 0 : i32
    %c0_i32_1 = arith.constant 0 : i32
    return %c0_i32, %c0_i32_0 : i32, i32
  }
  func.func @transform_6(%arg0: i32) -> (i32, i32) {
    %c0_i32 = arith.constant 0 : i32
    %c0_i32_0 = arith.constant 0 : i32
    %c0_i32_1 = arith.constant 0 : i32
    return %c0_i32, %c0_i32_0 : i32, i32
  }
  func.func @transform_7(%arg0: i32) -> (i32, i32) {
    %c0_i32 = arith.constant 0 : i32
    %c0_i32_0 = arith.constant 0 : i32
    %c0_i32_1 = arith.constant 0 : i32
    return %c0_i32, %c0_i32_0 : i32, i32
  }
  func.func @transform_8(%arg0: i32) -> (i32, i32) {
    %c0_i32 = arith.constant 0 : i32
    %c0_i32_0 = arith.constant 0 : i32
    %c0_i32_1 = arith.constant 0 : i32
    return %c0_i32, %c0_i32_0 : i32, i32
  }
  func.func @transform_9(%arg0: i32) -> (i32, i32) {
    %c0_i32 = arith.constant 0 : i32
    %c0_i32_0 = arith.constant 0 : i32
    %c0_i32_1 = arith.constant 0 : i32
    return %c0_i32, %c0_i32_0 : i32, i32
  }
  func.func @transform_10(%arg0: i32) -> (i32, i32) {
    %c0_i32 = arith.constant 0 : i32
    %c0_i32_0 = arith.constant 0 : i32
    %c0_i32_1 = arith.constant 0 : i32
    return %c0_i32, %c0_i32_0 : i32, i32
  }
  func.func @transform_11(%arg0: i32) -> (i32, i32) {
    %c0_i32 = arith.constant 0 : i32
    %c0_i32_0 = arith.constant 0 : i32
    return %c0_i32, %arg0 : i32, i32
  }
}

</mosaic_0001>

<llo_original>
// kernel: tpu_custom_call.1
$region0: #{tpu_custom_call.1}
  #allocation0 [shape = 'u32[]', space=smem, size = 0x4, offset = 0x4, fixed_abs, tag = 'smem constant byte address 0x4 - core index']
  #allocation1 [shape = 'u32[144,128]{1,0:T(1,128)}', space=vmem, size = 0x12000, scoped, tag = 'internal scratch']
  #allocation2 [shape = 'f32[1,1]{1,0:T(1,128)S(6)}', space=smem, size = 0x200, scoped, tag = 'scoped memory for tpu_custom_call.1']
  %s0 = inlined_call_operand.vmem [shape: f32[128,8], index: 0, kind: input, shape index: {}]
  %s1 = inlined_call_operand.vmem [shape: f32[128,4], index: 1, kind: input, shape index: {}]
  %s2 = inlined_call_operand.vmem [shape: bf16[8,128], index: 2, kind: input, shape index: {}]
  %s3 = inlined_call_operand.vmem [shape: bf16[4,128], index: 3, kind: input, shape index: {}]
  %s4 = inlined_call_operand.vmem [shape: f32[1,128], index: 4, kind: input, shape index: {}]
  %s5 = inlined_call_operand.vmem [shape: bf16[128,128], index: 5, kind: input, shape index: {}]
  %s6 = inlined_call_operand.vmem [shape: f32[1,128], index: 6, kind: input, shape index: {}]
  %s7 = inlined_call_operand.vmem [shape: bf16[128,128], index: 7, kind: input, shape index: {}]
  %s8 = inlined_call_operand.vmem [shape: f32[1,128], index: 8, kind: input, shape index: {}]
  %s9 = inlined_call_operand.vmem [shape: f32[1,128], index: 9, kind: input, shape index: {}]
  %s10 = inlined_call_operand.<no memory space> [shape: f32[1,1], index: 10, kind: input, shape index: {}]
  %s11 = inlined_call_operand.hbm [shape: f32[1,128], index: 11, kind: output, shape index: {}]
  %s12 = sld [smem:[#allocation0]]
  $region54: #{tpu_custom_call.1} parent=0
    _
  %s14 = ssub.s32 1, %s12
  %s15 = scalar_select 0, %s14, %s12
  %16 = sst [smem:[#allocation2]] %s10
  $region1: #{tpu_custom_call.1} parent=0
    #allocation3 [shape = 'u8[512]{0}', space=vmem, size = 0x400, scoped, tag = 'output window, operand 0, single buffered']
    #allocation4 [shape = 's32[1]{0}', space=sflag, size = 0x4, scoped, tag = 'scoped memory for tpu_custom_call.1']
    %17 = vsyncpa [#allocation4], 0
    // Predicated region
    $region2: #{tpu_custom_call.1} parent=1 // pred_check
      _
    $region3: #{tpu_custom_call.1} parent=1 // pred_check_branch
      %19 = sbr.rel (0) target = $region5
    $region4: #{tpu_custom_call.1} parent=1 // pred_region
      _
    $region5: #{tpu_custom_call.1} parent=1 // pred_fallthru
      _
    // Predicated region
    $region6: #{tpu_custom_call.1} parent=1 // pred_check
      _
    $region7: #{tpu_custom_call.1} parent=1 // pred_check_branch
      %21 = sbr.rel (0) target = $region9
    $region8: #{tpu_custom_call.1} parent=1 // pred_region
      _
    $region9: #{tpu_custom_call.1} parent=1 // pred_fallthru
      _
    // Predicated region
    $region10: #{tpu_custom_call.1} parent=1 // pred_check
      _
    $region11: #{tpu_custom_call.1} parent=1 // pred_check_branch
      %23 = sbr.rel (0) target = $region13
    $region12: #{tpu_custom_call.1} parent=1 // pred_region
      _
    $region13: #{tpu_custom_call.1} parent=1 // pred_fallthru
      _
    // Predicated region
    $region14: #{tpu_custom_call.1} parent=1 // pred_check
      _
    $region15: #{tpu_custom_call.1} parent=1 // pred_check_branch
      %25 = sbr.rel (0) target = $region17
    $region16: #{tpu_custom_call.1} parent=1 // pred_region
      _
    $region17: #{tpu_custom_call.1} parent=1 // pred_fallthru
      _
    // Predicated region
    $region18: #{tpu_custom_call.1} parent=1 // pred_check
      _
    $region19: #{tpu_custom_call.1} parent=1 // pred_check_branch
      %27 = sbr.rel (0) target = $region21
    $region20: #{tpu_custom_call.1} parent=1 // pred_region
      _
    $region21: #{tpu_custom_call.1} parent=1 // pred_fallthru
      _
    // Predicated region
    $region22: #{tpu_custom_call.1} parent=1 // pred_check
      _
    $region23: #{tpu_custom_call.1} parent=1 // pred_check_branch
      %29 = sbr.rel (0) target = $region25
    $region24: #{tpu_custom_call.1} parent=1 // pred_region
      _
    $region25: #{tpu_custom_call.1} parent=1 // pred_fallthru
      _
    // Predicated region
    $region26: #{tpu_custom_call.1} parent=1 // pred_check
      _
    $region27: #{tpu_custom_call.1} parent=1 // pred_check_branch
      %31 = sbr.rel (0) target = $region29
    $region28: #{tpu_custom_call.1} parent=1 // pred_region
      _
    $region29: #{tpu_custom_call.1} parent=1 // pred_fallthru
      _
    // Predicated region
    $region30: #{tpu_custom_call.1} parent=1 // pred_check
      _
    $region31: #{tpu_custom_call.1} parent=1 // pred_check_branch
      %33 = sbr.rel (0) target = $region33
    $region32: #{tpu_custom_call.1} parent=1 // pred_region
      _
    $region33: #{tpu_custom_call.1} parent=1 // pred_fallthru
      _
    // Predicated region
    $region34: #{tpu_custom_call.1} parent=1 // pred_check
      _
    $region35: #{tpu_custom_call.1} parent=1 // pred_check_branch
      %35 = sbr.rel (0) target = $region37
    $region36: #{tpu_custom_call.1} parent=1 // pred_region
      _
    $region37: #{tpu_custom_call.1} parent=1 // pred_fallthru
      _
    // Predicated region
    $region38: #{tpu_custom_call.1} parent=1 // pred_check
      _
    $region39: #{tpu_custom_call.1} parent=1 // pred_check_branch
      %37 = sbr.rel (0) target = $region41
    $region40: #{tpu_custom_call.1} parent=1 // pred_region
      _
    $region41: #{tpu_custom_call.1} parent=1 // pred_fallthru
      _
    // Predicated region
    $region42: #{tpu_custom_call.1} parent=1 // pred_check
      _
    $region43: #{tpu_custom_call.1} parent=1 // pred_check_branch
      %39 = sbr.rel (0) target = $region45
    $region44: #{tpu_custom_call.1} parent=1 // pred_region
      _
    $region45: #{tpu_custom_call.1} parent=1 // pred_fallthru
      _
    %v41 = vld [vmem:[%s0] sm:$0xff]
    %v42 = vld [vmem:[%s0 + $0x8] sm:$0xff]
    %v43 = vld [vmem:[%s0 + $0x10] sm:$0xff]
    %v44 = vld [vmem:[%s0 + $0x18] sm:$0xff]
    %v45 = vld [vmem:[%s0 + $0x20] sm:$0xff]
    %v46 = vld [vmem:[%s0 + $0x28] sm:$0xff]
    %v47 = vld [vmem:[%s0 + $0x30] sm:$0xff]
    %v48 = vld [vmem:[%s0 + $0x38] sm:$0xff]
    %v49 = vld [vmem:[%s0 + $0x40] sm:$0xff]
    %v50 = vld [vmem:[%s0 + $0x48] sm:$0xff]
    %v51 = vld [vmem:[%s0 + $0x50] sm:$0xff]
    %v52 = vld [vmem:[%s0 + $0x58] sm:$0xff]
    %v53 = vld [vmem:[%s0 + $0x60] sm:$0xff]
    %v54 = vld [vmem:[%s0 + $0x68] sm:$0xff]
    %v55 = vld [vmem:[%s0 + $0x70] sm:$0xff]
    %v56 = vld [vmem:[%s0 + $0x78] sm:$0xff]
    %v57 = vpack.c.bf16 %v42, %v41
    %v58 = vpack.c.bf16 %v44, %v43
    %v59 = vpack.c.bf16 %v46, %v45
    %v60 = vpack.c.bf16 %v48, %v47
    %v61 = vpack.c.bf16 %v50, %v49
    %v62 = vpack.c.bf16 %v52, %v51
    %v63 = vpack.c.bf16 %v54, %v53
    %v64 = vpack.c.bf16 %v56, %v55
    %v65 = vld [vmem:[%s2] sm:$0xf]
    %v66 = vld [vmem:[%s1] sm:$0xff]
    %v67 = vld [vmem:[%s1 + $0x8] sm:$0xff]
    %v68 = vld [vmem:[%s1 + $0x10] sm:$0xff]
    %v69 = vld [vmem:[%s1 + $0x18] sm:$0xff]
    %v70 = vld [vmem:[%s1 + $0x20] sm:$0xff]
    %v71 = vld [vmem:[%s1 + $0x28] sm:$0xff]
    %v72 = vld [vmem:[%s1 + $0x30] sm:$0xff]
    %v73 = vld [vmem:[%s1 + $0x38] sm:$0xff]
    %v74 = vld [vmem:[%s1 + $0x40] sm:$0xff]
    %v75 = vld [vmem:[%s1 + $0x48] sm:$0xff]
    %v76 = vld [vmem:[%s1 + $0x50] sm:$0xff]
    %v77 = vld [vmem:[%s1 + $0x58] sm:$0xff]
    %v78 = vld [vmem:[%s1 + $0x60] sm:$0xff]
    %v79 = vld [vmem:[%s1 + $0x68] sm:$0xff]
    %v80 = vld [vmem:[%s1 + $0x70] sm:$0xff]
    %v81 = vld [vmem:[%s1 + $0x78] sm:$0xff]
    %v82 = vpack.c.bf16 %v67, %v66
    %v83 = vpack.c.bf16 %v69, %v68
    %v84 = vpack.c.bf16 %v71, %v70
    %v85 = vpack.c.bf16 %v73, %v72
    %v86 = vpack.c.bf16 %v75, %v74
    %v87 = vpack.c.bf16 %v77, %v76
    %v88 = vpack.c.bf16 %v79, %v78
    %v89 = vpack.c.bf16 %v81, %v80
    %v90 = vld [vmem:[%s3] sm:$0x3]
    %vm91 = vcmask 31744
    %v93 = vsel %vm91, %v82, 0
    %v96 = vsel %vm91, %v83, 0
    %v99 = vsel %vm91, %v84, 0
    %v102 = vsel %vm91, %v85, 0
    %v105 = vsel %vm91, %v86, 0
    %v108 = vsel %vm91, %v87, 0
    %v111 = vsel %vm91, %v88, 0
    %v114 = vsel %vm91, %v89, 0
    %vm116 = vcmask 1041408
    %v118 = vsel %vm116, %v90, 0
    %120 = vmatprep.subr.bf16.mxu0 0
    %121 = vmatpush1.bf16.msra.mxu0 0
    %122 = vmatprep.subr.bf16.mxu0 0
    %123 = vmatpush1.bf16.msra.mxu0 0
    %124 = vmatprep.subr.bf16.mxu0 0
    %125 = vmatpush1.bf16.msra.mxu0 0
    %126 = vmatprep.subr.bf16.mxu0 0
    %127 = vmatpush1.bf16.msra.mxu0 0
    %128 = vmatprep.subr.bf16.mxu0 0
    %129 = vmatpush1.bf16.msra.mxu0 0
    %130 = vmatprep.subr.bf16.mxu0 0
    %131 = vmatpush1.bf16.msra.mxu0 0
    %132 = vmatprep.subr.bf16.mxu0 0
    %133 = vmatpush1.bf16.msra.mxu0 0
    %134 = vmatprep.subr.bf16.mxu0 0
    %135 = vmatpush1.bf16.msra.mxu0 %v118
    %136 = vmatprep.subr.bf16.mxu0 0
    %137 = vmatpush2.bf16.msra.mxu0 0
    %138 = vmatprep.subr.bf16.mxu0 0
    %139 = vmatpush2.bf16.msra.mxu0 0
    %140 = vmatprep.subr.bf16.mxu0 0
    %141 = vmatpush2.bf16.msra.mxu0 0
    %142 = vmatprep.subr.bf16.mxu0 0
    %143 = vmatpush2.bf16.msra.mxu0 0
    %144 = vmatprep.subr.bf16.mxu0 0
    %145 = vmatpush2.bf16.msra.mxu0 0
    %146 = vmatprep.subr.bf16.mxu0 0
    %147 = vmatpush2.bf16.msra.mxu0 0
    %148 = vmatprep.subr.bf16.mxu0 0
    %149 = vmatpush2.bf16.msra.mxu0 0
    %150 = vmatprep.subr.bf16.mxu0 0
    %151 = vmatpush2.bf16.msra.mxu0 0
    %152 = vmatprep.mubr.bf16.mxu0 0
    %153 = vmatmul.mubr.bf16.gmra.mxu0 %v93
    %v154 = vpop.f32.mrf.mxu0
    %v155 = vadd.f32 0.0, %v154
    %v156 = vpop.f32.mrf.mxu0
    %v157 = vpop.f32.mrf.mxu0
    %v158 = vadd.f32 0.0, %v157
    %v159 = vpop.f32.mrf.mxu0
    %160 = vmatprep.mubr.bf16.mxu0 0
    %161 = vmatmul.mubr.bf16.gmra.mxu0 %v96
    %v162 = vpop.f32.mrf.mxu0
    %v163 = vadd.f32 0.0, %v162
    %v164 = vpop.f32.mrf.mxu0
    %v165 = vpop.f32.mrf.mxu0
    %v166 = vadd.f32 0.0, %v165
    %v167 = vpop.f32.mrf.mxu0
    %168 = vmatprep.mubr.bf16.mxu0 0
    %169 = vmatmul.mubr.bf16.gmra.mxu0 %v99
    %v170 = vpop.f32.mrf.mxu0
    %v171 = vadd.f32 0.0, %v170
    %v172 = vpop.f32.mrf.mxu0
    %v173 = vpop.f32.mrf.mxu0
    %v174 = vadd.f32 0.0, %v173
    %v175 = vpop.f32.mrf.mxu0
    %176 = vmatprep.mubr.bf16.mxu0 0
    %177 = vmatmul.mubr.bf16.gmra.mxu0 %v102
    %v178 = vpop.f32.mrf.mxu0
    %v179 = vadd.f32 0.0, %v178
    %v180 = vpop.f32.mrf.mxu0
    %v181 = vpop.f32.mrf.mxu0
    %v182 = vadd.f32 0.0, %v181
    %v183 = vpop.f32.mrf.mxu0
    %184 = vmatprep.mubr.bf16.mxu0 0
    %185 = vmatmul.mubr.bf16.gmra.mxu0 %v105
    %v186 = vpop.f32.mrf.mxu0
    %v187 = vadd.f32 0.0, %v186
    %v188 = vpop.f32.mrf.mxu0
    %v189 = vpop.f32.mrf.mxu0
    %v190 = vadd.f32 0.0, %v189
    %v191 = vpop.f32.mrf.mxu0
    %192 = vmatprep.mubr.bf16.mxu0 0
    %193 = vmatmul.mubr.bf16.gmra.mxu0 %v108
    %v194 = vpop.f32.mrf.mxu0
    %v195 = vadd.f32 0.0, %v194
    %v196 = vpop.f32.mrf.mxu0
    %v197 = vpop.f32.mrf.mxu0
    %v198 = vadd.f32 0.0, %v197
    %v199 = vpop.f32.mrf.mxu0
    %200 = vmatprep.mubr.bf16.mxu0 0
    %201 = vmatmul.mubr.bf16.gmra.mxu0 %v111
    %v202 = vpop.f32.mrf.mxu0
    %v203 = vadd.f32 0.0, %v202
    %v204 = vpop.f32.mrf.mxu0
    %v205 = vpop.f32.mrf.mxu0
    %v206 = vadd.f32 0.0, %v205
    %v207 = vpop.f32.mrf.mxu0
    %208 = vmatprep.mubr.bf16.mxu0 0
    %209 = vmatmul.mubr.bf16.gmra.mxu0 %v114
    %v210 = vpop.f32.mrf.mxu0
    %v211 = vadd.f32 0.0, %v210
    %v212 = vpop.f32.mrf.mxu0
    %v213 = vpop.f32.mrf.mxu0
    %v214 = vadd.f32 0.0, %v213
    %v215 = vpop.f32.mrf.mxu0
    %216 = vdwg.mxu0
    %vm217 = vcmask 64512
    %v219 = vsel %vm217, %v57, 0
    %v222 = vsel %vm217, %v58, 0
    %v225 = vsel %vm217, %v59, 0
    %v228 = vsel %vm217, %v60, 0
    %v231 = vsel %vm217, %v61, 0
    %v234 = vsel %vm217, %v62, 0
    %v237 = vsel %vm217, %v63, 0
    %v240 = vsel %vm217, %v64, 0
    %vm242 = vcmask 1043456
    %v244 = vsel %vm242, %v65, 0
    %246 = vmatprep.subr.bf16.mxu0 0
    %247 = vmatpush1.bf16.msra.mxu0 0
    %248 = vmatprep.subr.bf16.mxu0 0
    %249 = vmatpush1.bf16.msra.mxu0 0
    %250 = vmatprep.subr.bf16.mxu0 0
    %251 = vmatpush1.bf16.msra.mxu0 0
    %252 = vmatprep.subr.bf16.mxu0 0
    %253 = vmatpush1.bf16.msra.mxu0 0
    %254 = vmatprep.subr.bf16.mxu0 0
    %255 = vmatpush1.bf16.msra.mxu0 0
    %256 = vmatprep.subr.bf16.mxu0 0
    %257 = vmatpush1.bf16.msra.mxu0 0
    %258 = vmatprep.subr.bf16.mxu0 0
    %259 = vmatpush1.bf16.msra.mxu0 0
    %260 = vmatprep.subr.bf16.mxu0 0
    %261 = vmatpush1.bf16.msra.mxu0 %v244
    %262 = vmatprep.subr.bf16.mxu0 0
    %263 = vmatpush2.bf16.msra.mxu0 0
    %264 = vmatprep.subr.bf16.mxu0 0
    %265 = vmatpush2.bf16.msra.mxu0 0
    %266 = vmatprep.subr.bf16.mxu0 0
    %267 = vmatpush2.bf16.msra.mxu0 0
    %268 = vmatprep.subr.bf16.mxu0 0
    %269 = vmatpush2.bf16.msra.mxu0 0
    %270 = vmatprep.subr.bf16.mxu0 0
    %271 = vmatpush2.bf16.msra.mxu0 0
    %272 = vmatprep.subr.bf16.mxu0 0
    %273 = vmatpush2.bf16.msra.mxu0 0
    %274 = vmatprep.subr.bf16.mxu0 0
    %275 = vmatpush2.bf16.msra.mxu0 0
    %276 = vmatprep.subr.bf16.mxu0 0
    %277 = vmatpush2.bf16.msra.mxu0 0
    %278 = vmatprep.mubr.bf16.mxu0 0
    %279 = vmatmul.mubr.bf16.gmra.mxu0 %v219
    %v280 = vpop.f32.mrf.mxu0
    %v281 = vadd.f32 %v155, %v280
    %v282 = vpop.f32.mrf.mxu0
    %v283 = vpop.f32.mrf.mxu0
    %v284 = vadd.f32 %v158, %v283
    %v285 = vpop.f32.mrf.mxu0
    %286 = vmatprep.mubr.bf16.mxu0 0
    %287 = vmatmul.mubr.bf16.gmra.mxu0 %v222
    %v288 = vpop.f32.mrf.mxu0
    %v289 = vadd.f32 %v163, %v288
    %v290 = vpop.f32.mrf.mxu0
    %v291 = vpop.f32.mrf.mxu0
    %v292 = vadd.f32 %v166, %v291
    %v293 = vpop.f32.mrf.mxu0
    %294 = vmatprep.mubr.bf16.mxu0 0
    %295 = vmatmul.mubr.bf16.gmra.mxu0 %v225
    %v296 = vpop.f32.mrf.mxu0
    %v297 = vadd.f32 %v171, %v296
    %v298 = vpop.f32.mrf.mxu0
    %v299 = vpop.f32.mrf.mxu0
    %v300 = vadd.f32 %v174, %v299
    %v301 = vpop.f32.mrf.mxu0
    %302 = vmatprep.mubr.bf16.mxu0 0
    %303 = vmatmul.mubr.bf16.gmra.mxu0 %v228
    %v304 = vpop.f32.mrf.mxu0
    %v305 = vadd.f32 %v179, %v304
    %v306 = vpop.f32.mrf.mxu0
    %v307 = vpop.f32.mrf.mxu0
    %v308 = vadd.f32 %v182, %v307
    %v309 = vpop.f32.mrf.mxu0
    %310 = vmatprep.mubr.bf16.mxu0 0
    %311 = vmatmul.mubr.bf16.gmra.mxu0 %v231
    %v312 = vpop.f32.mrf.mxu0
    %v313 = vadd.f32 %v187, %v312
    %v314 = vpop.f32.mrf.mxu0
    %v315 = vpop.f32.mrf.mxu0
    %v316 = vadd.f32 %v190, %v315
    %v317 = vpop.f32.mrf.mxu0
    %318 = vmatprep.mubr.bf16.mxu0 0
    %319 = vmatmul.mubr.bf16.gmra.mxu0 %v234
    %v320 = vpop.f32.mrf.mxu0
    %v321 = vadd.f32 %v195, %v320
    %v322 = vpop.f32.mrf.mxu0
    %v323 = vpop.f32.mrf.mxu0
    %v324 = vadd.f32 %v198, %v323
    %v325 = vpop.f32.mrf.mxu0
    %326 = vmatprep.mubr.bf16.mxu0 0
    %327 = vmatmul.mubr.bf16.gmra.mxu0 %v237
    %v328 = vpop.f32.mrf.mxu0
    %v329 = vadd.f32 %v203, %v328
    %v330 = vpop.f32.mrf.mxu0
    %v331 = vpop.f32.mrf.mxu0
    %v332 = vadd.f32 %v206, %v331
    %v333 = vpop.f32.mrf.mxu0
    %334 = vmatprep.mubr.bf16.mxu0 0
    %335 = vmatmul.mubr.bf16.gmra.mxu0 %v240
    %v336 = vpop.f32.mrf.mxu0
    %v337 = vadd.f32 %v211, %v336
    %v338 = vpop.f32.mrf.mxu0
    %v339 = vpop.f32.mrf.mxu0
    %v340 = vadd.f32 %v214, %v339
    %v341 = vpop.f32.mrf.mxu0
    %342 = vdwg.mxu0
    %v343 = vld [vmem:[%s4] sm:$0x1]
    %v345 = vlaneseq
    %v346 = vshrl.u32 %v345, 7
    %v347 = vsub.s32 0, %v346
    %v348 = vrot.slane %v343, %v347
    %v350 = vadd.f32 %v281, %v348
    %v351 = vadd.f32 %v284, %v348
    %v352 = vadd.f32 %v289, %v348
    %v353 = vadd.f32 %v292, %v348
    %v354 = vadd.f32 %v297, %v348
    %v355 = vadd.f32 %v300, %v348
    %v356 = vadd.f32 %v305, %v348
    %v357 = vadd.f32 %v308, %v348
    %v358 = vadd.f32 %v313, %v348
    %v359 = vadd.f32 %v316, %v348
    %v360 = vadd.f32 %v321, %v348
    %v361 = vadd.f32 %v324, %v348
    %v362 = vadd.f32 %v329, %v348
    %v363 = vadd.f32 %v332, %v348
    %v364 = vadd.f32 %v337, %v348
    %v365 = vadd.f32 %v340, %v348
    %v366 = vmax.f32 %v350, 0.0
    %v367 = vmax.f32 %v351, 0.0
    %v368 = vmax.f32 %v352, 0.0
    %v369 = vmax.f32 %v353, 0.0
    %v370 = vmax.f32 %v354, 0.0
    %v371 = vmax.f32 %v355, 0.0
    %v372 = vmax.f32 %v356, 0.0
    %v373 = vmax.f32 %v357, 0.0
    %v374 = vmax.f32 %v358, 0.0
    %v375 = vmax.f32 %v359, 0.0
    %v376 = vmax.f32 %v360, 0.0
    %v377 = vmax.f32 %v361, 0.0
    %v378 = vmax.f32 %v362, 0.0
    %v379 = vmax.f32 %v363, 0.0
    %v380 = vmax.f32 %v364, 0.0
    %v381 = vmax.f32 %v365, 0.0
    %v382 = vpack.c.bf16 %v367, %v366
    %v383 = vpack.c.bf16 %v369, %v368
    %v384 = vpack.c.bf16 %v371, %v370
    %v385 = vpack.c.bf16 %v373, %v372
    %v386 = vpack.c.bf16 %v375, %v374
    %v387 = vpack.c.bf16 %v377, %v376
    %v388 = vpack.c.bf16 %v379, %v378
    %v389 = vpack.c.bf16 %v381, %v380
    %v390 = vld [vmem:[%s5] sm:$0xf]
    %v391 = vld [vmem:[%s5 + $0x4] sm:$0xf]
    %v392 = vld [vmem:[%s5 + $0x8] sm:$0xf]
    %v393 = vld [vmem:[%s5 + $0xc] sm:$0xf]
    %v394 = vld [vmem:[%s5 + $0x10] sm:$0xf]
    %v395 = vld [vmem:[%s5 + $0x14] sm:$0xf]
    %v396 = vld [vmem:[%s5 + $0x18] sm:$0xf]
    %v397 = vld [vmem:[%s5 + $0x1c] sm:$0xf]
    %v398 = vld [vmem:[%s5 + $0x20] sm:$0xf]
    %v399 = vld [vmem:[%s5 + $0x24] sm:$0xf]
    %v400 = vld [vmem:[%s5 + $0x28] sm:$0xf]
    %v401 = vld [vmem:[%s5 + $0x2c] sm:$0xf]
    %v402 = vld [vmem:[%s5 + $0x30] sm:$0xf]
    %v403 = vld [vmem:[%s5 + $0x34] sm:$0xf]
    %v404 = vld [vmem:[%s5 + $0x38] sm:$0xf]
    %v405 = vld [vmem:[%s5 + $0x3c] sm:$0xf]
    %v406 = vld [vmem:[%s6] sm:$0x1]
    %v408 = vlaneseq
    %v409 = vshrl.u32 %v408, 7
    %v410 = vsub.s32 0, %v409
    %v411 = vrot.slane %v406, %v410
    %v429 = vunpack.c.l.b16 %v390
    %v430 = vunpack.c.l.b16 %v391
    %v431 = vunpack.c.l.b16 %v392
    %v432 = vunpack.c.l.b16 %v393
    %v433 = vunpack.c.l.b16 %v394
    %v434 = vunpack.c.l.b16 %v395
    %v435 = vunpack.c.l.b16 %v396
    %v436 = vunpack.c.l.b16 %v397
    %v437 = vunpack.c.l.b16 %v398
    %v438 = vunpack.c.l.b16 %v399
    %v439 = vunpack.c.l.b16 %v400
    %v440 = vunpack.c.l.b16 %v401
    %v441 = vunpack.c.l.b16 %v402
    %v442 = vunpack.c.l.b16 %v403
    %v443 = vunpack.c.l.b16 %v404
    %v444 = vunpack.c.l.b16 %v405
    %v445 = vpack.c.b16 %v430, %v429
    %v446 = vpack.c.b16 %v432, %v431
    %v447 = vpack.c.b16 %v434, %v433
    %v448 = vpack.c.b16 %v436, %v435
    %v449 = vpack.c.b16 %v438, %v437
    %v450 = vpack.c.b16 %v440, %v439
    %v451 = vpack.c.b16 %v442, %v441
    %v452 = vpack.c.b16 %v444, %v443
    %461 = vmatprep.subr.bf16.mxu0 0
    %462 = vmatpush1.bf16.msra.mxu0 %v452
    %463 = vmatprep.subr.bf16.mxu0 0
    %464 = vmatpush1.bf16.msra.mxu0 %v451
    %465 = vmatprep.subr.bf16.mxu0 0
    %466 = vmatpush1.bf16.msra.mxu0 %v450
    %467 = vmatprep.subr.bf16.mxu0 0
    %468 = vmatpush1.bf16.msra.mxu0 %v449
    %469 = vmatprep.subr.bf16.mxu0 0
    %470 = vmatpush1.bf16.msra.mxu0 %v448
    %471 = vmatprep.subr.bf16.mxu0 0
    %472 = vmatpush1.bf16.msra.mxu0 %v447
    %473 = vmatprep.subr.bf16.mxu0 0
    %474 = vmatpush1.bf16.msra.mxu0 %v446
    %475 = vmatprep.subr.bf16.mxu0 0
    %476 = vmatpush1.bf16.msra.mxu0 %v445
    %477 = vmatprep.subr.bf16.mxu0 0
    %478 = vmatpush2.bf16.msra.mxu0 0
    %479 = vmatprep.subr.bf16.mxu0 0
    %480 = vmatpush2.bf16.msra.mxu0 0
    %481 = vmatprep.subr.bf16.mxu0 0
    %482 = vmatpush2.bf16.msra.mxu0 0
    %483 = vmatprep.subr.bf16.mxu0 0
    %484 = vmatpush2.bf16.msra.mxu0 0
    %485 = vmatprep.subr.bf16.mxu0 0
    %486 = vmatpush2.bf16.msra.mxu0 0
    %487 = vmatprep.subr.bf16.mxu0 0
    %488 = vmatpush2.bf16.msra.mxu0 0
    %489 = vmatprep.subr.bf16.mxu0 0
    %490 = vmatpush2.bf16.msra.mxu0 0
    %491 = vmatprep.subr.bf16.mxu0 0
    %492 = vmatpush2.bf16.msra.mxu0 0
    %493 = vmatprep.mubr.bf16.mxu0 0
    %494 = vmatmul.mubr.bf16.gmra.mxu0 %v382
    %v495 = vpop.f32.mrf.mxu0
    %v496 = vadd.f32 %v411, %v495
    %v497 = vpop.f32.mrf.mxu0
    %v498 = vpop.f32.mrf.mxu0
    %v499 = vadd.f32 %v411, %v498
    %v500 = vpop.f32.mrf.mxu0
    %501 = vmatprep.mubr.bf16.mxu0 0
    %502 = vmatmul.mubr.bf16.gmra.mxu0 %v383
    %v503 = vpop.f32.mrf.mxu0
    %v504 = vadd.f32 %v411, %v503
    %v505 = vpop.f32.mrf.mxu0
    %v506 = vpop.f32.mrf.mxu0
    %v507 = vadd.f32 %v411, %v506
    %v508 = vpop.f32.mrf.mxu0
    %509 = vmatprep.mubr.bf16.mxu0 0
    %510 = vmatmul.mubr.bf16.gmra.mxu0 %v384
    %v511 = vpop.f32.mrf.mxu0
    %v512 = vadd.f32 %v411, %v511
    %v513 = vpop.f32.mrf.mxu0
    %v514 = vpop.f32.mrf.mxu0
    %v515 = vadd.f32 %v411, %v514
    %v516 = vpop.f32.mrf.mxu0
    %517 = vmatprep.mubr.bf16.mxu0 0
    %518 = vmatmul.mubr.bf16.gmra.mxu0 %v385
    %v519 = vpop.f32.mrf.mxu0
    %v520 = vadd.f32 %v411, %v519
    %v521 = vpop.f32.mrf.mxu0
    %v522 = vpop.f32.mrf.mxu0
    %v523 = vadd.f32 %v411, %v522
    %v524 = vpop.f32.mrf.mxu0
    %525 = vmatprep.mubr.bf16.mxu0 0
    %526 = vmatmul.mubr.bf16.gmra.mxu0 %v386
    %v527 = vpop.f32.mrf.mxu0
    %v528 = vadd.f32 %v411, %v527
    %v529 = vpop.f32.mrf.mxu0
    %v530 = vpop.f32.mrf.mxu0
    %v531 = vadd.f32 %v411, %v530
    %v532 = vpop.f32.mrf.mxu0
    %533 = vmatprep.mubr.bf16.mxu0 0
    %534 = vmatmul.mubr.bf16.gmra.mxu0 %v387
    %v535 = vpop.f32.mrf.mxu0
    %v536 = vadd.f32 %v411, %v535
    %v537 = vpop.f32.mrf.mxu0
    %v538 = vpop.f32.mrf.mxu0
    %v539 = vadd.f32 %v411, %v538
    %v540 = vpop.f32.mrf.mxu0
    %541 = vmatprep.mubr.bf16.mxu0 0
    %542 = vmatmul.mubr.bf16.gmra.mxu0 %v388
    %v543 = vpop.f32.mrf.mxu0
    %v544 = vadd.f32 %v411, %v543
    %v545 = vpop.f32.mrf.mxu0
    %v546 = vpop.f32.mrf.mxu0
    %v547 = vadd.f32 %v411, %v546
    %v548 = vpop.f32.mrf.mxu0
    %549 = vmatprep.mubr.bf16.mxu0 0
    %550 = vmatmul.mubr.bf16.gmra.mxu0 %v389
    %v551 = vpop.f32.mrf.mxu0
    %v552 = vadd.f32 %v411, %v551
    %v553 = vpop.f32.mrf.mxu0
    %v554 = vpop.f32.mrf.mxu0
    %v555 = vadd.f32 %v411, %v554
    %v556 = vpop.f32.mrf.mxu0
    %557 = vdwg.mxu0
    %v558 = vmax.f32 %v496, 0.0
    %v559 = vmax.f32 %v499, 0.0
    %v560 = vmax.f32 %v504, 0.0
    %v561 = vmax.f32 %v507, 0.0
    %v562 = vmax.f32 %v512, 0.0
    %v563 = vmax.f32 %v515, 0.0
    %v564 = vmax.f32 %v520, 0.0
    %v565 = vmax.f32 %v523, 0.0
    %v566 = vmax.f32 %v528, 0.0
    %v567 = vmax.f32 %v531, 0.0
    %v568 = vmax.f32 %v536, 0.0
    %v569 = vmax.f32 %v539, 0.0
    %v570 = vmax.f32 %v544, 0.0
    %v571 = vmax.f32 %v547, 0.0
    %v572 = vmax.f32 %v552, 0.0
    %v573 = vmax.f32 %v555, 0.0
    %v574 = vpack.c.bf16 %v559, %v558
    %v575 = vpack.c.bf16 %v561, %v560
    %v576 = vpack.c.bf16 %v563, %v562
    %v577 = vpack.c.bf16 %v565, %v564
    %v578 = vpack.c.bf16 %v567, %v566
    %v579 = vpack.c.bf16 %v569, %v568
    %v580 = vpack.c.bf16 %v571, %v570
    %v581 = vpack.c.bf16 %v573, %v572
    %v582 = vld [vmem:[%s7] sm:$0xf]
    %v583 = vld [vmem:[%s7 + $0x4] sm:$0xf]
    %v584 = vld [vmem:[%s7 + $0x8] sm:$0xf]
    %v585 = vld [vmem:[%s7 + $0xc] sm:$0xf]
    %v586 = vld [vmem:[%s7 + $0x10] sm:$0xf]
    %v587 = vld [vmem:[%s7 + $0x14] sm:$0xf]
    %v588 = vld [vmem:[%s7 + $0x18] sm:$0xf]
    %v589 = vld [vmem:[%s7 + $0x1c] sm:$0xf]
    %v590 = vld [vmem:[%s7 + $0x20] sm:$0xf]
    %v591 = vld [vmem:[%s7 + $0x24] sm:$0xf]
    %v592 = vld [vmem:[%s7 + $0x28] sm:$0xf]
    %v593 = vld [vmem:[%s7 + $0x2c] sm:$0xf]
    %v594 = vld [vmem:[%s7 + $0x30] sm:$0xf]
    %v595 = vld [vmem:[%s7 + $0x34] sm:$0xf]
    %v596 = vld [vmem:[%s7 + $0x38] sm:$0xf]
    %v597 = vld [vmem:[%s7 + $0x3c] sm:$0xf]
    %v598 = vld [vmem:[%s8] sm:$0x1]
    %v600 = vlaneseq
    %v601 = vshrl.u32 %v600, 7
    %v602 = vsub.s32 0, %v601
    %v603 = vrot.slane %v598, %v602
    %v621 = vunpack.c.l.b16 %v582
    %v622 = vunpack.c.l.b16 %v583
    %v623 = vunpack.c.l.b16 %v584
    %v624 = vunpack.c.l.b16 %v585
    %v625 = vunpack.c.l.b16 %v586
    %v626 = vunpack.c.l.b16 %v587
    %v627 = vunpack.c.l.b16 %v588
    %v628 = vunpack.c.l.b16 %v589
    %v629 = vunpack.c.l.b16 %v590
    %v630 = vunpack.c.l.b16 %v591
    %v631 = vunpack.c.l.b16 %v592
    %v632 = vunpack.c.l.b16 %v593
    %v633 = vunpack.c.l.b16 %v594
    %v634 = vunpack.c.l.b16 %v595
    %v635 = vunpack.c.l.b16 %v596
    %v636 = vunpack.c.l.b16 %v597
    %v637 = vpack.c.b16 %v622, %v621
    %v638 = vpack.c.b16 %v624, %v623
    %v639 = vpack.c.b16 %v626, %v625
    %v640 = vpack.c.b16 %v628, %v627
    %v641 = vpack.c.b16 %v630, %v629
    %v642 = vpack.c.b16 %v632, %v631
    %v643 = vpack.c.b16 %v634, %v633
    %v644 = vpack.c.b16 %v636, %v635
    %653 = vmatprep.subr.bf16.mxu0 0
    %654 = vmatpush1.bf16.msra.mxu0 %v644
    %655 = vmatprep.subr.bf16.mxu0 0
    %656 = vmatpush1.bf16.msra.mxu0 %v643
    %657 = vmatprep.subr.bf16.mxu0 0
    %658 = vmatpush1.bf16.msra.mxu0 %v642
    %659 = vmatprep.subr.bf16.mxu0 0
    %660 = vmatpush1.bf16.msra.mxu0 %v641
    %661 = vmatprep.subr.bf16.mxu0 0
    %662 = vmatpush1.bf16.msra.mxu0 %v640
    %663 = vmatprep.subr.bf16.mxu0 0
    %664 = vmatpush1.bf16.msra.mxu0 %v639
    %665 = vmatprep.subr.bf16.mxu0 0
    %666 = vmatpush1.bf16.msra.mxu0 %v638
    %667 = vmatprep.subr.bf16.mxu0 0
    %668 = vmatpush1.bf16.msra.mxu0 %v637
    %669 = vmatprep.subr.bf16.mxu0 0
    %670 = vmatpush2.bf16.msra.mxu0 0
    %671 = vmatprep.subr.bf16.mxu0 0
    %672 = vmatpush2.bf16.msra.mxu0 0
    %673 = vmatprep.subr.bf16.mxu0 0
    %674 = vmatpush2.bf16.msra.mxu0 0
    %675 = vmatprep.subr.bf16.mxu0 0
    %676 = vmatpush2.bf16.msra.mxu0 0
    %677 = vmatprep.subr.bf16.mxu0 0
    %678 = vmatpush2.bf16.msra.mxu0 0
    %679 = vmatprep.subr.bf16.mxu0 0
    %680 = vmatpush2.bf16.msra.mxu0 0
    %681 = vmatprep.subr.bf16.mxu0 0
    %682 = vmatpush2.bf16.msra.mxu0 0
    %683 = vmatprep.subr.bf16.mxu0 0
    %684 = vmatpush2.bf16.msra.mxu0 0
    %685 = vmatprep.mubr.bf16.mxu0 0
    %686 = vmatmul.mubr.bf16.gmra.mxu0 %v574
    %v687 = vpop.f32.mrf.mxu0
    %v688 = vadd.f32 %v603, %v687
    %v689 = vpop.f32.mrf.mxu0
    %v690 = vpop.f32.mrf.mxu0
    %v691 = vadd.f32 %v603, %v690
    %v692 = vpop.f32.mrf.mxu0
    %693 = vmatprep.mubr.bf16.mxu0 0
    %694 = vmatmul.mubr.bf16.gmra.mxu0 %v575
    %v695 = vpop.f32.mrf.mxu0
    %v696 = vadd.f32 %v603, %v695
    %v697 = vpop.f32.mrf.mxu0
    %v698 = vpop.f32.mrf.mxu0
    %v699 = vadd.f32 %v603, %v698
    %v700 = vpop.f32.mrf.mxu0
    %701 = vmatprep.mubr.bf16.mxu0 0
    %702 = vmatmul.mubr.bf16.gmra.mxu0 %v576
    %v703 = vpop.f32.mrf.mxu0
    %v704 = vadd.f32 %v603, %v703
    %v705 = vpop.f32.mrf.mxu0
    %v706 = vpop.f32.mrf.mxu0
    %v707 = vadd.f32 %v603, %v706
    %v708 = vpop.f32.mrf.mxu0
    %709 = vmatprep.mubr.bf16.mxu0 0
    %710 = vmatmul.mubr.bf16.gmra.mxu0 %v577
    %v711 = vpop.f32.mrf.mxu0
    %v712 = vadd.f32 %v603, %v711
    %v713 = vpop.f32.mrf.mxu0
    %v714 = vpop.f32.mrf.mxu0
    %v715 = vadd.f32 %v603, %v714
    %v716 = vpop.f32.mrf.mxu0
    %717 = vmatprep.mubr.bf16.mxu0 0
    %718 = vmatmul.mubr.bf16.gmra.mxu0 %v578
    %v719 = vpop.f32.mrf.mxu0
    %v720 = vadd.f32 %v603, %v719
    %v721 = vpop.f32.mrf.mxu0
    %v722 = vpop.f32.mrf.mxu0
    %v723 = vadd.f32 %v603, %v722
    %v724 = vpop.f32.mrf.mxu0
    %725 = vmatprep.mubr.bf16.mxu0 0
    %726 = vmatmul.mubr.bf16.gmra.mxu0 %v579
    %v727 = vpop.f32.mrf.mxu0
    %v728 = vadd.f32 %v603, %v727
    %v729 = vpop.f32.mrf.mxu0
    %v730 = vpop.f32.mrf.mxu0
    %v731 = vadd.f32 %v603, %v730
    %v732 = vpop.f32.mrf.mxu0
    %733 = vmatprep.mubr.bf16.mxu0 0
    %734 = vmatmul.mubr.bf16.gmra.mxu0 %v580
    %v735 = vpop.f32.mrf.mxu0
    %v736 = vadd.f32 %v603, %v735
    %v737 = vpop.f32.mrf.mxu0
    %v738 = vpop.f32.mrf.mxu0
    %v739 = vadd.f32 %v603, %v738
    %v740 = vpop.f32.mrf.mxu0
    %741 = vmatprep.mubr.bf16.mxu0 0
    %742 = vmatmul.mubr.bf16.gmra.mxu0 %v581
    %v743 = vpop.f32.mrf.mxu0
    %v744 = vadd.f32 %v603, %v743
    %v745 = vpop.f32.mrf.mxu0
    %v746 = vpop.f32.mrf.mxu0
    %v747 = vadd.f32 %v603, %v746
    %v748 = vpop.f32.mrf.mxu0
    %749 = vdwg.mxu0
    %v750 = vmax.f32 %v688, 0.0
    %v751 = vmax.f32 %v691, 0.0
    %v752 = vmax.f32 %v696, 0.0
    %v753 = vmax.f32 %v699, 0.0
    %v754 = vmax.f32 %v704, 0.0
    %v755 = vmax.f32 %v707, 0.0
    %v756 = vmax.f32 %v712, 0.0
    %v757 = vmax.f32 %v715, 0.0
    %v758 = vmax.f32 %v720, 0.0
    %v759 = vmax.f32 %v723, 0.0
    %v760 = vmax.f32 %v728, 0.0
    %v761 = vmax.f32 %v731, 0.0
    %v762 = vmax.f32 %v736, 0.0
    %v763 = vmax.f32 %v739, 0.0
    %v764 = vmax.f32 %v744, 0.0
    %v765 = vmax.f32 %v747, 0.0
    %v766 = vld [vmem:[%s9] sm:$0x1]
    %s767 = sld [smem:[#allocation2]]
    %v768 = vstv %s767
    %769 = vmatprep.subr.mxu0 0.0
    %770 = vmatpush1.xpose.msra.mxu0 %v765
    %771 = vmatprep.subr.mxu0 0.0
    %772 = vmatpush1.xpose.msra.mxu0 %v764
    %773 = vmatprep.subr.mxu0 0.0
    %774 = vmatpush1.xpose.msra.mxu0 %v763
    %775 = vmatprep.subr.mxu0 0.0
    %776 = vmatpush1.xpose.msra.mxu0 %v762
    %777 = vmatprep.subr.mxu0 0.0
    %778 = vmatpush1.xpose.msra.mxu0 %v761
    %779 = vmatprep.subr.mxu0 0.0
    %780 = vmatpush1.xpose.msra.mxu0 %v760
    %781 = vmatprep.subr.mxu0 0.0
    %782 = vmatpush1.xpose.msra.mxu0 %v759
    %783 = vmatprep.subr.mxu0 0.0
    %784 = vmatpush1.xpose.msra.mxu0 %v758
    %785 = vmatprep.subr.mxu0 0.0
    %786 = vmatpush1.xpose.msra.mxu0 %v757
    %787 = vmatprep.subr.mxu0 0.0
    %788 = vmatpush1.xpose.msra.mxu0 %v756
    %789 = vmatprep.subr.mxu0 0.0
    %790 = vmatpush1.xpose.msra.mxu0 %v755
    %791 = vmatprep.subr.mxu0 0.0
    %792 = vmatpush1.xpose.msra.mxu0 %v754
    %793 = vmatprep.subr.mxu0 0.0
    %794 = vmatpush1.xpose.msra.mxu0 %v753
    %795 = vmatprep.subr.mxu0 0.0
    %796 = vmatpush1.xpose.msra.mxu0 %v752
    %797 = vmatprep.subr.mxu0 0.0
    %798 = vmatpush1.xpose.msra.mxu0 %v751
    %799 = vmatprep.subr.mxu0 0.0
    %800 = vmatpush1.xpose.msra.mxu0 %v750
    %801 = vmatprep.subr.mxu0 0.0
    %802 = vmatpush2.xpose.msra.mxu0 0.0
    %803 = vmatprep.subr.mxu0 0.0
    %804 = vmatpush2.xpose.msra.mxu0 0.0
    %805 = vmatprep.subr.mxu0 0.0
    %806 = vmatpush2.xpose.msra.mxu0 0.0
    %807 = vmatprep.subr.mxu0 0.0
    %808 = vmatpush2.xpose.msra.mxu0 0.0
    %809 = vmatprep.subr.mxu0 0.0
    %810 = vmatpush2.xpose.msra.mxu0 0.0
    %811 = vmatprep.subr.mxu0 0.0
    %812 = vmatpush2.xpose.msra.mxu0 0.0
    %813 = vmatprep.subr.mxu0 0.0
    %814 = vmatpush2.xpose.msra.mxu0 0.0
    %815 = vmatprep.subr.mxu0 0.0
    %816 = vmatpush2.xpose.msra.mxu0 0.0
    %817 = vmatprep.subr.mxu0 0.0
    %818 = vmatpush2.xpose.msra.mxu0 0.0
    %819 = vmatprep.subr.mxu0 0.0
    %820 = vmatpush2.xpose.msra.mxu0 0.0
    %821 = vmatprep.subr.mxu0 0.0
    %822 = vmatpush2.xpose.msra.mxu0 0.0
    %823 = vmatprep.subr.mxu0 0.0
    %824 = vmatpush2.xpose.msra.mxu0 0.0
    %825 = vmatprep.subr.mxu0 0.0
    %826 = vmatpush2.xpose.msra.mxu0 0.0
    %827 = vmatprep.subr.mxu0 0.0
    %828 = vmatpush2.xpose.msra.mxu0 0.0
    %829 = vmatprep.subr.mxu0 0.0
    %830 = vmatpush2.xpose.msra.mxu0 0.0
    %831 = vmatprep.subr.mxu0 0.0
    %832 = vmatpush2.xpose.msra.mxu0 0.0
    %833 = vmatprep.mubr.f32.mxu0 0.0
    %834 = vmatmul.mubr.f32.gmra.mxu0 %v766
    %v835 = vpop.f32.mrf.mxu0
    %v836 = vadd.f32 %v768, %v835
    %v837 = vpop.f32.mrf.mxu0
    %838 = vdwg.mxu0
    %839 = vst [vmem:[#allocation3] sm:$0x1] %v836
    // Predicated region
    $region46: #{tpu_custom_call.1} parent=1 // pred_check
      _
    $region47: #{tpu_custom_call.1} parent=1 // pred_check_branch
      %841 = sbr.rel (0) target = $region49
    $region48: #{tpu_custom_call.1} parent=1 // pred_region
      %s843 = ssub.s32 16, 16
      %844 = vsyncadd [#allocation4], %s843
      %s846 = sshll.u32 [#allocation3], 4
      %s847 = int_to_ptr.vmem [resolvable:$true] %s846
      %849 = dma.vmem_to_hbm [thread:$0]  %s847, 16, %s11, [#allocation4]
    $region49: #{tpu_custom_call.1} parent=1 // pred_fallthru
      _
    // Predicated region
    $region50: #{tpu_custom_call.1} parent=1 // pred_check
      _
    $region51: #{tpu_custom_call.1} parent=1 // pred_check_branch
      %851 = sbr.rel (0) target = $region53
    $region52: #{tpu_custom_call.1} parent=1 // pred_region
      %852 = dma.done [#allocation4], 16
    $region53: #{tpu_custom_call.1} parent=1 // pred_fallthru
      _
    %853 = vsyncpa [#allocation4], 1

</llo_original>
